<compile_context>
chip_gen: v5e
topology: v5e:2x2
jax: 0.10.0
libtpu: 0.0.40
codegen_flags: <defaults>
</compile_context>

<pallas_src>
import math

import jax
import jax.numpy as jnp
from jax.experimental import pallas as pl
from jax.experimental.pallas import tpu as pltpu


def _layer_scale_kernel(x_ref, gamma_ref, o_ref):
    # (tile_rows, tile_cols) * (1, tile_cols) — pure VPU broadcast multiply.
    # jnp promotion handles mixed precision (e.g. bf16 x * f32 gamma -> f32).
    o_ref[...] = (x_ref[...] * gamma_ref[...]).astype(o_ref.dtype)


def _vmem_capacity_bytes() -> int:
    try:
        return int(pltpu.get_tpu_info().vmem_capacity_bytes)
    except Exception:
        return 64 * 1024 * 1024  # conservative fallback (v7x per-TensorCore)


def _round_down(x: int, m: int) -> int:
    return (x // m) * m


def _round_up(x: int, m: int) -> int:
    return -(-x // m) * m


def _pick_tiles(R, D, in_isz, out_isz, vmem_cap):
    """Pick (tile_rows, tile_cols) for streaming an (R, D) elementwise multiply."""
    # Live VMEM per block "cell": up to 3 input buffers (Buffered(3)) + 2 output buffers.
    per_cell = 3 * in_isz + 2 * out_isz
    budget_cells = max(8 * 128, min(16 << 20, vmem_cap // 4) // per_cell)

    # Column (lane) axis: full width when a sublane-height tile fits the budget,
    # else 128-multiple column tiles so huge dims never blow v7x's 64 MiB VMEM.
    if D <= 128 or 8 * D <= budget_cells:
        tile_cols = D
    else:
        tile_cols = min(_round_down(budget_cells // 8, 128),
                        _round_down(D, 128), 64 * 1024)
        tile_cols = max(tile_cols, 128)

    # Row (sublane) axis: near-equal 8-aligned blocks, even block count so the
    # "parallel" row axis balances across v7x's two TensorCores (harmless on
    # single-TC v5e/v6e).
    if R <= 8:
        tile_rows = R
    else:
        max_rows = max(8, _round_down(budget_cells // tile_cols, 8))
        nblk = pl.cdiv(R, max_rows)
        nblk = max(2, nblk + (nblk % 2))
        tile_rows = min(_round_up(pl.cdiv(R, nblk), 8), max_rows)
    return tile_rows, tile_cols


def _x_block_spec(shape, index_map, buffers):
    if buffers > 2:
        try:
            return pl.BlockSpec(shape, index_map, pipeline_mode=pl.Buffered(buffers))
        except Exception:  # jax build without pipeline_mode: fall back to default
            pass
    return pl.BlockSpec(shape, index_map)


def _layer_scale_2d(x2, gamma_row, out_dtype):
    """y[r, c] = x2[r, c] * gamma_row[c] on a 2-D slab."""
    R, D = x2.shape
    in_isz = jnp.dtype(x2.dtype).itemsize
    out_isz = jnp.dtype(out_dtype).itemsize
    g_isz = jnp.dtype(gamma_row.dtype).itemsize
    vmem_cap = _vmem_capacity_bytes()

    tile_rows, tile_cols = _pick_tiles(R, D, in_isz, out_isz, vmem_cap)
    grid = (pl.cdiv(R, tile_rows), pl.cdiv(D, tile_cols))
    n_blocks = grid[0] * grid[1]

    # Compute is ~0; every step is pure DMA.  A third input buffer hides DMA
    # issue latency once the grid is deep enough to make use of it.
    n_in_buf = 3 if n_blocks >= 4 else 2

    gamma2 = gamma_row.reshape(1, D)

    # VMEM limit derived from the tiles actually chosen (+ slack), not 0.9*cap.
    blk = tile_rows * tile_cols
    vmem_limit = (n_in_buf * blk * in_isz + 2 * blk * out_isz
                  + 2 * 8 * tile_cols * g_isz + (2 << 20))
    vmem_limit = int(min(max(vmem_limit, 8 << 20), vmem_cap * 0.9))

    # Donate the activation slab into the output when dtypes match (PyTorch's
    # inplace mul_ analogue); halves peak HBM footprint, zero-risk elementwise.
    aliases = {0: 0} if jnp.dtype(x2.dtype) == jnp.dtype(out_dtype) else {}

    return pl.pallas_call(
        _layer_scale_kernel,
        out_shape=jax.ShapeDtypeStruct((R, D), out_dtype),
        grid=grid,
        in_specs=[
            _x_block_spec((tile_rows, tile_cols), lambda i, j: (i, j), n_in_buf),
            pl.BlockSpec((1, tile_cols), lambda i, j: (0, j)),  # gamma: constant over rows
        ],
        out_specs=pl.BlockSpec((tile_rows, tile_cols), lambda i, j: (i, j)),
        input_output_aliases=aliases,
        compiler_params=pltpu.CompilerParams(
            dimension_semantics=("parallel", "parallel"),
            vmem_limit_bytes=vmem_limit,
        ),
    )(x2, gamma2)


def layer_scale(x: jax.Array, gamma: jax.Array) -> jax.Array:
    """LayerScale forward: y = x * gamma, gamma broadcast over the last axis."""
    orig_shape = x.shape
    dim = orig_shape[-1]
    rows = int(math.prod(orig_shape[:-1]))
    out_dtype = jnp.result_type(x.dtype, gamma.dtype)   # PyTorch promotion semantics

    gamma_row = gamma.reshape(-1)
    x2d = x.reshape(rows, dim)

    # Fold g consecutive rows into the lane axis so the last dim is a multiple
    # of 128 (unmasked vst, lane-dense DMA).  g == 1 when dim is already dense.
    g = 128 // math.gcd(dim, 128)
    rows_main = (rows // g) * g
    tail = rows - rows_main

    outs = []
    if rows_main:
        xm = x2d if tail == 0 else x2d[:rows_main]
        xm = xm.reshape(rows_main // g, dim * g)
        gm = jnp.tile(gamma_row, g) if g > 1 else gamma_row
        outs.append(_layer_scale_2d(xm, gm, out_dtype).reshape(rows_main, dim))
    if tail:
        # TODO(synk): the < g leftover rows take a tiny masked-store call plus a
        # concatenate; pad rows to a multiple of g at the call site when cheaper.
        outs.append(_layer_scale_2d(x2d[rows_main:], gamma_row, out_dtype))

    out = outs[0] if len(outs) == 1 else jnp.concatenate(outs, axis=0)
    return out.reshape(orig_shape)


if __name__ == "__main__":
    # Deterministic setup consistent with LayerScale(dim=32, init_values=1e-5).
    batch, seq, hidden = 2, 8, 32
    init_values = 1e-5

    key = jax.random.PRNGKey(0)
    x = jax.random.normal(key, (batch, seq, hidden), dtype=jnp.float32)
    gamma = init_values * jnp.ones((hidden,), dtype=jnp.float32)

    y = layer_scale(x, gamma)
    jax.block_until_ready(y)
    assert y.shape == x.shape and y.dtype == x.dtype
    assert jnp.allclose(y, x * gamma, rtol=1e-6, atol=1e-12)

    # bf16 + non-divisible row count (ragged row blocks, lane-dense 256 width).
    xb = jax.random.normal(jax.random.PRNGKey(1), (3, 37, 256), dtype=jnp.bfloat16)
    gb = (init_values * jnp.ones((256,), jnp.float32)).astype(jnp.bfloat16)
    yb = layer_scale(xb, gb)
    jax.block_until_ready(yb)
    assert yb.dtype == jnp.bfloat16
    assert jnp.allclose(yb.astype(jnp.float32), (xb * gb).astype(jnp.float32),
                        rtol=1e-2, atol=1e-6)

    # Mixed precision: bf16 activations * f32 gamma promotes to f32 (PyTorch semantics).
    gb32 = init_values * jnp.ones((256,), jnp.float32)
    ym = layer_scale(xb, gb32)
    jax.block_until_ready(ym)
    assert ym.dtype == jnp.float32
    assert jnp.allclose(ym, xb.astype(jnp.float32) * gb32, rtol=1e-6, atol=1e-10)

    # Awkward dim (80 lanes) with a row count not divisible by the fold factor
    # (g=8): main rows run lane-dense, the < g tail rows take the tiny call.
    xa = jax.random.normal(jax.random.PRNGKey(2), (5, 7, 80), dtype=jnp.float32)
    ga = init_values * jnp.ones((80,), jnp.float32)
    ya = layer_scale(xa, ga)
    jax.block_until_ready(ya)
    assert jnp.allclose(ya, xa * ga, rtol=1e-6, atol=1e-12)

    # Deep row grid (exercises the Buffered(3) triple-buffered input path).
    xl = jax.random.normal(jax.random.PRNGKey(3), (16, 256, 512), dtype=jnp.float32)
    gl = init_values * jnp.ones((512,), jnp.float32)
    yl = layer_scale(xl, gl)
    jax.block_until_ready(yl)
    assert jnp.allclose(yl, xl * gl, rtol=1e-6, atol=1e-12)

    # Very wide dim (exercises the column-tiled grid path).
    xw = jax.random.normal(jax.random.PRNGKey(4), (8, 131072), dtype=jnp.float32)
    gw = init_values * jnp.ones((131072,), jnp.float32)
    yw = layer_scale(xw, gw)
    jax.block_until_ready(yw)
    assert jnp.allclose(yw, xw * gw, rtol=1e-6, atol=1e-12)

    print("KERNEL_OK")
</pallas_src>

<mosaic_0001>
module attributes {stable_mosaic.version = 11 : i64} {
  func.func @_layer_scale_kernel(%arg0: i32, %arg1: i32, %arg2: memref<4x128xf32, #tpu.memory_space<vmem>>, %arg3: memref<1x128xf32, #tpu.memory_space<vmem>>, %arg4: memref<4x128xf32, #tpu.memory_space<vmem>>) attributes {dimension_semantics = [#tpu.dimension_semantics<parallel>, #tpu.dimension_semantics<parallel>], iteration_bounds = array<i64: 1, 1>, scalar_prefetch = 0 : i64, scratch_operands = 0 : i64, tpu.core_type = #tpu.core_type<tc>, window_params = [{transform_indices = @transform_0, window_bounds = array<i64: 4, 128>}, {transform_indices = @transform_1, window_bounds = array<i64: 1, 128>}, {transform_indices = @transform_2, window_bounds = array<i64: 4, 128>}]} {
    %c0 = arith.constant 0 : index
    %c0_0 = arith.constant 0 : index
    %0 = vector.load %arg2[%c0, %c0_0] : memref<4x128xf32, #tpu.memory_space<vmem>>, vector<4x128xf32>
    %c0_1 = arith.constant 0 : index
    %c0_2 = arith.constant 0 : index
    %1 = vector.load %arg3[%c0_1, %c0_2] : memref<1x128xf32, #tpu.memory_space<vmem>>, vector<1x128xf32>
    %2 = vector.broadcast %1 : vector<1x128xf32> to vector<4x128xf32>
    %3 = arith.mulf %0, %2 : vector<4x128xf32>
    %c0_3 = arith.constant 0 : index
    %c0_4 = arith.constant 0 : index
    %4 = vector.load %arg4[%c0_3, %c0_4] : memref<4x128xf32, #tpu.memory_space<vmem>>, vector<4x128xf32>
    tpu.vector_store %arg4[%c0_3, %c0_4], %3 {strides = array<i32>} : memref<4x128xf32, #tpu.memory_space<vmem>>, vector<4x128xf32>,
    return
  }
  func.func @transform_0(%arg0: i32, %arg1: i32) -> (i32, i32) {
    %c0_i32 = arith.constant 0 : i32
    return %arg0, %arg1 : i32, i32
  }
  func.func @transform_1(%arg0: i32, %arg1: i32) -> (i32, i32) {
    %c0_i32 = arith.constant 0 : i32
    %c0_i32_0 = arith.constant 0 : i32
    return %c0_i32, %arg1 : i32, i32
  }
  func.func @transform_2(%arg0: i32, %arg1: i32) -> (i32, i32) {
    %c0_i32 = arith.constant 0 : i32
    return %arg0, %arg1 : i32, i32
  }
}

</mosaic_0001>

<llo_original>
// kernel: tpu_custom_call.1
$region0: #{tpu_custom_call.1}
  #allocation0 [shape = 'u32[]', space=smem, size = 0x4, offset = 0x4, fixed_abs, tag = 'smem constant byte address 0x4 - core index']
  #allocation1 [shape = 'u32[72,128]{1,0:T(1,128)}', space=vmem, size = 0x9000, scoped, tag = 'internal scratch']
  %s0 = inlined_call_operand.hbm [shape: f32[4,128], index: 0, kind: input, shape index: {}, may-alias: {0,2}]
  %s1 = inlined_call_operand.vmem [shape: f32[1,128], index: 1, kind: input, shape index: {}]
  %s2 = inlined_call_operand.hbm [shape: f32[4,128], index: 2, kind: output, shape index: {}, may-alias: {0,2}]
  %s3 = sld [smem:[#allocation0]]
  $region22: #{tpu_custom_call.1} parent=0
    _
  %s5 = ssub.s32 1, %s3
  %s6 = scalar_select 0, %s5, %s3
  $region1: #{tpu_custom_call.1} parent=0
    #allocation2 [shape = 'u8[2048]{0}', space=vmem, size = 0x800, scoped, tag = 'input window, operand 0, single buffered']
    #allocation3 [shape = 's32[1]{0}', space=sflag, size = 0x4, scoped, tag = 'scoped memory for tpu_custom_call.1']
    #allocation4 [shape = 's32[1]{0}', space=sflag, size = 0x4, scoped, tag = 'scoped memory for tpu_custom_call.1']
    #allocation5 [shape = 'u8[2048]{0}', space=vmem, size = 0x800, scoped, tag = 'output window, operand 0, single buffered']
    %7 = vsyncpa [#allocation3], 0
    %8 = vsyncpa [#allocation4], 0
    // Predicated region
    $region2: #{tpu_custom_call.1} parent=1 // pred_check
      _
    $region3: #{tpu_custom_call.1} parent=1 // pred_check_branch
      %10 = sbr.rel (0) target = $region5
    $region4: #{tpu_custom_call.1} parent=1 // pred_region
      %12 = vsyncadd [#allocation3], 0
      %s14 = sshll.u32 %s0, 4
      %s15 = int_to_ptr.hbm [resolvable:$true] %s14
      %s16 = sshll.u32 [#allocation2], 4
      %s17 = int_to_ptr.vmem [resolvable:$true] %s16
      %19 = dma.hbm_to_vmem [thread:$0]  %s15, 64, %s17, [#allocation3]
    $region5: #{tpu_custom_call.1} parent=1 // pred_fallthru
      _
    // Predicated region
    $region6: #{tpu_custom_call.1} parent=1 // pred_check
      _
    $region7: #{tpu_custom_call.1} parent=1 // pred_check_branch
      %21 = sbr.rel (0) target = $region9
    $region8: #{tpu_custom_call.1} parent=1 // pred_region
      _
    $region9: #{tpu_custom_call.1} parent=1 // pred_fallthru
      _
    // Predicated region
    $region10: #{tpu_custom_call.1} parent=1 // pred_check
      _
    $region11: #{tpu_custom_call.1} parent=1 // pred_check_branch
      %23 = sbr.rel (0) target = $region13
    $region12: #{tpu_custom_call.1} parent=1 // pred_region
      %25 = dma.done [#allocation3], 64
    $region13: #{tpu_custom_call.1} parent=1 // pred_fallthru
      _
    %v26 = vld [vmem:[#allocation2] sm:$0xf]
    %v27 = vld [vmem:[%s1] sm:$0x1]
    %v29 = vperm.slane %v27, 0
    %v31 = vmul.f32 %v26, %v29
    %32 = vst [vmem:[#allocation5] sm:$0xf] %v31
    // Predicated region
    $region14: #{tpu_custom_call.1} parent=1 // pred_check
      _
    $region15: #{tpu_custom_call.1} parent=1 // pred_check_branch
      %34 = sbr.rel (0) target = $region17
    $region16: #{tpu_custom_call.1} parent=1 // pred_region
      %36 = vsyncadd [#allocation4], 0
      %s38 = sshll.u32 [#allocation5], 4
      %s39 = int_to_ptr.vmem [resolvable:$true] %s38
      %s40 = sshll.u32 %s2, 4
      %s41 = int_to_ptr.hbm [resolvable:$true] %s40
      %43 = dma.vmem_to_hbm [thread:$0]  %s39, 64, %s41, [#allocation4]
    $region17: #{tpu_custom_call.1} parent=1 // pred_fallthru
      _
    // Predicated region
    $region18: #{tpu_custom_call.1} parent=1 // pred_check
      _
    $region19: #{tpu_custom_call.1} parent=1 // pred_check_branch
      %45 = sbr.rel (0) target = $region21
    $region20: #{tpu_custom_call.1} parent=1 // pred_region
      %47 = dma.done [#allocation4], 64
    $region21: #{tpu_custom_call.1} parent=1 // pred_fallthru
      _
    %48 = vsyncpa [#allocation3], 1
    %49 = vsyncpa [#allocation4], 1

</llo_original>
